<compile_context>
chip_gen: v7x
topology: tpu7x:2x2x1
jax: 0.10.0
libtpu: 0.0.40
codegen_flags: <defaults>
</compile_context>

<pallas_src>
import jax
import jax.numpy as jnp
from jax.experimental import pallas as pl
from jax.experimental.pallas import tpu as pltpu


def _round_up(x, m):
    return ((x + m - 1) // m) * m


def _visual_projection_kernel(vit_ref, cnn_ref, wv_ref, wc_ref, b_ref, o_ref):
    # vit_ref: (TB, Kv)   cnn_ref: (TB, Kc)
    # wv_ref:  (Kv, N)    wc_ref:  (Kc, N)    b_ref: (1, N)    o_ref: (TB, N)
    acc = jnp.dot(vit_ref[...], wv_ref[...], preferred_element_type=jnp.float32)
    acc = acc + jnp.dot(cnn_ref[...], wc_ref[...],
                        preferred_element_type=jnp.float32)
    o_ref[...] = (acc + b_ref[...]).astype(o_ref.dtype)


def visual_projection(vit_feat, cnn_feat, weight, bias, *, block_b=512,
                      operand_dtype=None):
    """Pallas equivalent of VisualProjection.forward.

    Args:
      vit_feat: (B, vit_dim)
      cnn_feat: (B, cnn_dim)
      weight:   (out_dim, vit_dim + cnn_dim)   -- PyTorch nn.Linear layout
      bias:     (out_dim,)
      block_b:  batch tile size (clamped to B, rounded to a sublane multiple).
      operand_dtype: optional MXU operand dtype (e.g. jnp.bfloat16 for prod);
        accumulation / bias add stay float32. None -> keep input dtype.
    Returns:
      (B, out_dim) in vit_feat.dtype.
    """
    B, vit_dim = vit_feat.shape
    Bc, cnn_dim = cnn_feat.shape
    out_dim, in_dim = weight.shape
    assert Bc == B, "batch mismatch between vit_feat and cnn_feat"
    assert in_dim == vit_dim + cnn_dim, "weight in_dim must be vit_dim + cnn_dim"

    out_dtype = vit_feat.dtype
    op_dtype = operand_dtype if operand_dtype is not None else vit_feat.dtype

    # One-time (outside the grid loop): split the PyTorch-layout weight into
    # the two concat halves and transpose to MXU-native (K, N).
    w_vit = weight[:, :vit_dim].T            # (vit_dim, out_dim)
    w_cnn = weight[:, vit_dim:].T            # (cnn_dim, out_dim)

    # Wrapper-side zero padding to lane multiples (128): lane-dense loads and
    # unmasked output stores. Padded K columns contribute zero to the dot.
    vit_p = _round_up(vit_dim, 128)
    cnn_p = _round_up(cnn_dim, 128)
    out_p = _round_up(out_dim, 128)

    if vit_p != vit_dim:
        vit_feat = jnp.pad(vit_feat, ((0, 0), (0, vit_p - vit_dim)))
        w_vit = jnp.pad(w_vit, ((0, vit_p - vit_dim), (0, 0)))
    if cnn_p != cnn_dim:
        cnn_feat = jnp.pad(cnn_feat, ((0, 0), (0, cnn_p - cnn_dim)))
        w_cnn = jnp.pad(w_cnn, ((0, cnn_p - cnn_dim), (0, 0)))
    if out_p != out_dim:
        w_vit = jnp.pad(w_vit, ((0, 0), (0, out_p - out_dim)))
        w_cnn = jnp.pad(w_cnn, ((0, 0), (0, out_p - out_dim)))
        bias = jnp.pad(bias, (0, out_p - out_dim))

    vit_feat = vit_feat.astype(op_dtype)
    cnn_feat = cnn_feat.astype(op_dtype)
    w_vit = w_vit.astype(op_dtype)
    w_cnn = w_cnn.astype(op_dtype)
    b2d = bias.reshape(1, out_p).astype(jnp.float32)

    # Batch tile: as large as allowed; sublane-aligned when it actually tiles.
    tb = min(block_b, B)
    if tb < B:
        tb = max(8, (tb // 8) * 8)
    grid = (pl.cdiv(B, tb),)

    # VMEM budget: double-buffered activation/output tiles + single-buffered
    # resident weights/bias, with slack. Floor at the common scoped default.
    op_bytes = jnp.dtype(op_dtype).itemsize
    out_bytes = jnp.dtype(out_dtype).itemsize
    vmem_est = (2 * tb * (vit_p + cnn_p) * op_bytes
                + 2 * tb * out_p * out_bytes
                + (vit_p + cnn_p) * out_p * op_bytes
                + out_p * 4)
    vmem_limit = min(max(int(1.5 * vmem_est) + (1 << 20), 32 * 1024 * 1024),
                     100 * 1024 * 1024)
    # TODO(synk): on v7x (64 MiB VMEM) shrink block_b / add an out_dim grid
    # axis if the resident weight alone approaches the VMEM budget.

    out = pl.pallas_call(
        _visual_projection_kernel,
        out_shape=jax.ShapeDtypeStruct((B, out_p), out_dtype),
        grid=grid,
        in_specs=[
            pl.BlockSpec((tb, vit_p), lambda i: (i, 0)),
            pl.BlockSpec((tb, cnn_p), lambda i: (i, 0)),
            # Constant-index weights/bias: VMEM-resident, single-buffered.
            pl.BlockSpec((vit_p, out_p), lambda i: (0, 0),
                         pipeline_mode=pl.Buffered(1)),
            pl.BlockSpec((cnn_p, out_p), lambda i: (0, 0),
                         pipeline_mode=pl.Buffered(1)),
            pl.BlockSpec((1, out_p), lambda i: (0, 0),
                         pipeline_mode=pl.Buffered(1)),
        ],
        out_specs=pl.BlockSpec((tb, out_p), lambda i: (i, 0)),
        compiler_params=pltpu.CompilerParams(
            dimension_semantics=("parallel",),
            vmem_limit_bytes=vmem_limit),
    )(vit_feat, cnn_feat, w_vit, w_cnn, b2d)

    if out_p != out_dim:
        out = out[:, :out_dim]
    return out


if __name__ == "__main__":
    # Small shapes consistent with the module.
    B, vit_dim, cnn_dim, out_dim = 4, 32, 16, 32

    key = jax.random.PRNGKey(0)
    k1, k2, k3, k4 = jax.random.split(key, 4)

    vit_feat = jax.random.normal(k1, (B, vit_dim), dtype=jnp.float32)
    cnn_feat = jax.random.normal(k2, (B, cnn_dim), dtype=jnp.float32)

    # Deterministic parameters, nn.Linear(vit_dim+cnn_dim, out_dim) layout.
    in_dim = vit_dim + cnn_dim
    bound = 1.0 / (in_dim ** 0.5)
    weight = jax.random.uniform(k3, (out_dim, in_dim), minval=-bound,
                                maxval=bound, dtype=jnp.float32)
    bias = jax.random.uniform(k4, (out_dim,), minval=-bound, maxval=bound,
                              dtype=jnp.float32)

    out = visual_projection(vit_feat, cnn_feat, weight, bias)
    out = jax.block_until_ready(out)

    # Pure-JAX reference: concat + linear (x @ W.T + b), full-precision matmul.
    combined = jnp.concatenate([vit_feat, cnn_feat], axis=1)
    ref = jnp.dot(combined, weight.T,
                  precision=jax.lax.Precision.HIGHEST) + bias

    assert out.shape == (B, out_dim)
    assert jnp.allclose(out, ref, atol=1e-4, rtol=1e-4), "mismatch vs reference"
    print("KERNEL_OK")
</pallas_src>

<mosaic_0001>
module attributes {stable_mosaic.version = 11 : i64} {
  func.func @_visual_projection_kernel(%arg0: i32, %arg1: memref<4x128xf32, #tpu.memory_space<vmem>>, %arg2: memref<4x128xf32, #tpu.memory_space<vmem>>, %arg3: memref<128x128xf32, #tpu.memory_space<vmem>>, %arg4: memref<128x128xf32, #tpu.memory_space<vmem>>, %arg5: memref<1x128xf32, #tpu.memory_space<vmem>>, %arg6: memref<4x128xf32, #tpu.memory_space<vmem>>) attributes {dimension_semantics = [#tpu.dimension_semantics<parallel>], iteration_bounds = array<i64: 1>, scalar_prefetch = 0 : i64, scratch_operands = 0 : i64, tpu.core_type = #tpu.core_type<tc>, window_params = [{transform_indices = @transform_0, window_bounds = array<i64: 4, 128>}, {transform_indices = @transform_1, window_bounds = array<i64: 4, 128>}, {pipeline_mode = #tpu.pipeline_mode<synchronous>, transform_indices = @transform_2, window_bounds = array<i64: 128, 128>}, {pipeline_mode = #tpu.pipeline_mode<synchronous>, transform_indices = @transform_3, window_bounds = array<i64: 128, 128>}, {pipeline_mode = #tpu.pipeline_mode<synchronous>, transform_indices = @transform_4, window_bounds = array<i64: 1, 128>}, {transform_indices = @transform_5, window_bounds = array<i64: 4, 128>}]} {
    %c0 = arith.constant 0 : index
    %c0_0 = arith.constant 0 : index
    %0 = vector.load %arg1[%c0, %c0_0] : memref<4x128xf32, #tpu.memory_space<vmem>>, vector<4x128xf32>
    %c0_1 = arith.constant 0 : index
    %c0_2 = arith.constant 0 : index
    %1 = vector.load %arg3[%c0_1, %c0_2] : memref<128x128xf32, #tpu.memory_space<vmem>>, vector<128x128xf32>
    %cst = arith.constant dense<0.000000e+00> : vector<4x128xf32>
    %2 = tpu.matmul %0, %1, %cst {dimension_numbers = #tpu.dot_dimension_numbers<[1], [0], [0], [1], [0, 0, 1, 1], [], []>} : vector<4x128xf32>, vector<128x128xf32>, vector<4x128xf32> -> vector<4x128xf32>
    %c0_3 = arith.constant 0 : index
    %c0_4 = arith.constant 0 : index
    %3 = vector.load %arg2[%c0_3, %c0_4] : memref<4x128xf32, #tpu.memory_space<vmem>>, vector<4x128xf32>
    %c0_5 = arith.constant 0 : index
    %c0_6 = arith.constant 0 : index
    %4 = vector.load %arg4[%c0_5, %c0_6] : memref<128x128xf32, #tpu.memory_space<vmem>>, vector<128x128xf32>
    %cst_7 = arith.constant dense<0.000000e+00> : vector<4x128xf32>
    %5 = tpu.matmul %3, %4, %cst_7 {dimension_numbers = #tpu.dot_dimension_numbers<[1], [0], [0], [1], [0, 0, 1, 1], [], []>} : vector<4x128xf32>, vector<128x128xf32>, vector<4x128xf32> -> vector<4x128xf32>
    %6 = arith.addf %2, %5 : vector<4x128xf32>
    %c0_8 = arith.constant 0 : index
    %c0_9 = arith.constant 0 : index
    %7 = vector.load %arg5[%c0_8, %c0_9] : memref<1x128xf32, #tpu.memory_space<vmem>>, vector<1x128xf32>
    %8 = vector.broadcast %7 : vector<1x128xf32> to vector<4x128xf32>
    %9 = arith.addf %6, %8 : vector<4x128xf32>
    %c0_10 = arith.constant 0 : index
    %c0_11 = arith.constant 0 : index
    %10 = vector.load %arg6[%c0_10, %c0_11] : memref<4x128xf32, #tpu.memory_space<vmem>>, vector<4x128xf32>
    tpu.vector_store %arg6[%c0_10, %c0_11], %9 {strides = array<i32>} : memref<4x128xf32, #tpu.memory_space<vmem>>, vector<4x128xf32>,
    return
  }
  func.func @transform_0(%arg0: i32) -> (i32, i32) {
    %c0_i32 = arith.constant 0 : i32
    %c0_i32_0 = arith.constant 0 : i32
    return %arg0, %c0_i32 : i32, i32
  }
  func.func @transform_1(%arg0: i32) -> (i32, i32) {
    %c0_i32 = arith.constant 0 : i32
    %c0_i32_0 = arith.constant 0 : i32
    return %arg0, %c0_i32 : i32, i32
  }
  func.func @transform_2(%arg0: i32) -> (i32, i32) {
    %c0_i32 = arith.constant 0 : i32
    %c0_i32_0 = arith.constant 0 : i32
    %c0_i32_1 = arith.constant 0 : i32
    return %c0_i32, %c0_i32_0 : i32, i32
  }
  func.func @transform_3(%arg0: i32) -> (i32, i32) {
    %c0_i32 = arith.constant 0 : i32
    %c0_i32_0 = arith.constant 0 : i32
    %c0_i32_1 = arith.constant 0 : i32
    return %c0_i32, %c0_i32_0 : i32, i32
  }
  func.func @transform_4(%arg0: i32) -> (i32, i32) {
    %c0_i32 = arith.constant 0 : i32
    %c0_i32_0 = arith.constant 0 : i32
    %c0_i32_1 = arith.constant 0 : i32
    return %c0_i32, %c0_i32_0 : i32, i32
  }
  func.func @transform_5(%arg0: i32) -> (i32, i32) {
    %c0_i32 = arith.constant 0 : i32
    %c0_i32_0 = arith.constant 0 : i32
    return %arg0, %c0_i32 : i32, i32
  }
}

</mosaic_0001>

<llo_original>
// kernel: tpu_custom_call.1
$region0: #{tpu_custom_call.1}
  #allocation0 [shape = 'u32[]', space=smem, size = 0x4, offset = 0x4, fixed_abs, tag = 'smem constant byte address 0x4 - core index']
  #allocation1 [shape = 'u32[144,128]{1,0:T(1,128)}', space=vmem, size = 0x12000, scoped, tag = 'internal scratch']
  %s0 = inlined_call_operand.hbm [shape: f32[4,128], index: 0, kind: input, shape index: {}]
  %s1 = inlined_call_operand.hbm [shape: f32[4,128], index: 1, kind: input, shape index: {}]
  %s2 = inlined_call_operand.hbm [shape: f32[128,128], index: 2, kind: input, shape index: {}]
  %s3 = inlined_call_operand.hbm [shape: f32[128,128], index: 3, kind: input, shape index: {}]
  %s4 = inlined_call_operand.vmem [shape: f32[1,128], index: 4, kind: input, shape index: {}]
  %s5 = inlined_call_operand.hbm [shape: f32[4,128], index: 5, kind: output, shape index: {}]
  %s6 = sld [smem:[#allocation0]]
  $region46: #{tpu_custom_call.1} parent=0
    _
  %s8 = ssub.s32 1, %s6
  %s9 = scalar_select 0, %s8, %s6
  $region1: #{tpu_custom_call.1} parent=0
    #allocation2 [shape = 'u8[2048]{0}', space=vmem, size = 0x800, scoped, tag = 'input window, operand 0, single buffered']
    #allocation3 [shape = 's32[1]{0}', space=sflag, size = 0x4, scoped, tag = 'scoped memory for tpu_custom_call.1']
    #allocation4 [shape = 's32[1]{0}', space=sflag, size = 0x4, scoped, tag = 'scoped memory for tpu_custom_call.1']
    #allocation5 [shape = 'u8[2048]{0}', space=vmem, size = 0x800, scoped, tag = 'input window, operand 1, single buffered']
    #allocation6 [shape = 's32[1]{0}', space=sflag, size = 0x4, scoped, tag = 'scoped memory for tpu_custom_call.1']
    #allocation7 [shape = 'u8[65536]{0}', space=vmem, size = 0x10000, scoped, tag = 'input window, operand 2, single buffered']
    #allocation8 [shape = 'u8[65536]{0}', space=vmem, size = 0x10000, scoped, tag = 'input window, operand 3, single buffered']
    #allocation9 [shape = 's32[1]{0}', space=sflag, size = 0x4, scoped, tag = 'scoped memory for tpu_custom_call.1']
    #allocation10 [shape = 'u8[2048]{0}', space=vmem, size = 0x800, scoped, tag = 'output window, operand 0, single buffered']
    %10 = vsyncpa [#allocation3], 0
    %11 = vsyncpa [#allocation6], 0
    %12 = vsyncpa [#allocation9], 0
    %13 = vsyncpa [#allocation4], 0
    // Predicated region
    $region2: #{tpu_custom_call.1} parent=1 // pred_check
      _
    $region3: #{tpu_custom_call.1} parent=1 // pred_check_branch
      %15 = sbr.rel (0) target = $region5
    $region4: #{tpu_custom_call.1} parent=1 // pred_region
      %s17 = ssub.s32 64, 64
      %18 = vsyncadd [#allocation3], %s17
      %s20 = sshll.u32 [#allocation2], 4
      %s21 = int_to_ptr.vmem [resolvable:$true] %s20
      %23 = dma.hbm_to_vmem [thread:$0]  %s0, 64, %s21, [#allocation3]
    $region5: #{tpu_custom_call.1} parent=1 // pred_fallthru
      _
    // Predicated region
    $region6: #{tpu_custom_call.1} parent=1 // pred_check
      _
    $region7: #{tpu_custom_call.1} parent=1 // pred_check_branch
      %25 = sbr.rel (0) target = $region9
    $region8: #{tpu_custom_call.1} parent=1 // pred_region
      %s27 = ssub.s32 64, 64
      %28 = vsyncadd [#allocation6], %s27
      %s30 = sshll.u32 [#allocation5], 4
      %s31 = int_to_ptr.vmem [resolvable:$true] %s30
      %33 = dma.hbm_to_vmem [thread:$0]  %s1, 64, %s31, [#allocation6]
    $region9: #{tpu_custom_call.1} parent=1 // pred_fallthru
      _
    // Predicated region
    $region10: #{tpu_custom_call.1} parent=1 // pred_check
      _
    $region11: #{tpu_custom_call.1} parent=1 // pred_check_branch
      %35 = sbr.rel (0) target = $region13
    $region12: #{tpu_custom_call.1} parent=1 // pred_region
      %s37 = ssub.s32 2048, 2048
      %38 = vsyncadd [#allocation6], %s37
      %s39 = sshll.u32 [#allocation7], 4
      %s40 = int_to_ptr.vmem [resolvable:$true] %s39
      %45 = dma.hbm_to_vmem [thread:$0]  %s2, 2048, %s40, [#allocation6], 128, 128, 8
    $region13: #{tpu_custom_call.1} parent=1 // pred_fallthru
      _
    // Predicated region
    $region14: #{tpu_custom_call.1} parent=1 // pred_check
      _
    $region15: #{tpu_custom_call.1} parent=1 // pred_check_branch
      %47 = sbr.rel (0) target = $region17
    $region16: #{tpu_custom_call.1} parent=1 // pred_region
      %s49 = ssub.s32 2048, 2048
      %50 = vsyncadd [#allocation9], %s49
      %s51 = sshll.u32 [#allocation8], 4
      %s52 = int_to_ptr.vmem [resolvable:$true] %s51
      %57 = dma.hbm_to_vmem [thread:$0]  %s3, 2048, %s52, [#allocation9], 128, 128, 8
    $region17: #{tpu_custom_call.1} parent=1 // pred_fallthru
      _
    // Predicated region
    $region18: #{tpu_custom_call.1} parent=1 // pred_check
      _
    $region19: #{tpu_custom_call.1} parent=1 // pred_check_branch
      %59 = sbr.rel (0) target = $region21
    $region20: #{tpu_custom_call.1} parent=1 // pred_region
      _
    $region21: #{tpu_custom_call.1} parent=1 // pred_fallthru
      _
    // Predicated region
    $region22: #{tpu_custom_call.1} parent=1 // pred_check
      _
    $region23: #{tpu_custom_call.1} parent=1 // pred_check_branch
      %61 = sbr.rel (0) target = $region25
    $region24: #{tpu_custom_call.1} parent=1 // pred_region
      %62 = dma.done [#allocation3], 64
    $region25: #{tpu_custom_call.1} parent=1 // pred_fallthru
      _
    // Predicated region
    $region26: #{tpu_custom_call.1} parent=1 // pred_check
      _
    $region27: #{tpu_custom_call.1} parent=1 // pred_check_branch
      %64 = sbr.rel (0) target = $region29
    $region28: #{tpu_custom_call.1} parent=1 // pred_region
      %65 = dma.done [#allocation6], 64
    $region29: #{tpu_custom_call.1} parent=1 // pred_fallthru
      _
    // Predicated region
    $region30: #{tpu_custom_call.1} parent=1 // pred_check
      _
    $region31: #{tpu_custom_call.1} parent=1 // pred_check_branch
      %67 = sbr.rel (0) target = $region33
    $region32: #{tpu_custom_call.1} parent=1 // pred_region
      %68 = dma.done [#allocation6], 2048
    $region33: #{tpu_custom_call.1} parent=1 // pred_fallthru
      _
    // Predicated region
    $region34: #{tpu_custom_call.1} parent=1 // pred_check
      _
    $region35: #{tpu_custom_call.1} parent=1 // pred_check_branch
      %70 = sbr.rel (0) target = $region37
    $region36: #{tpu_custom_call.1} parent=1 // pred_region
      %71 = dma.done [#allocation9], 2048
    $region37: #{tpu_custom_call.1} parent=1 // pred_fallthru
      _
    %v72 = vld [vmem:[#allocation2] sm:$0xf]
    %v73 = vld [vmem:[#allocation7] sm:$0xff]
    %v74 = vld [vmem:[#allocation7 + $0x8] sm:$0xff]
    %v75 = vld [vmem:[#allocation7 + $0x10] sm:$0xff]
    %v76 = vld [vmem:[#allocation7 + $0x18] sm:$0xff]
    %v77 = vld [vmem:[#allocation7 + $0x20] sm:$0xff]
    %v78 = vld [vmem:[#allocation7 + $0x28] sm:$0xff]
    %v79 = vld [vmem:[#allocation7 + $0x30] sm:$0xff]
    %v80 = vld [vmem:[#allocation7 + $0x38] sm:$0xff]
    %v81 = vld [vmem:[#allocation7 + $0x40] sm:$0xff]
    %v82 = vld [vmem:[#allocation7 + $0x48] sm:$0xff]
    %v83 = vld [vmem:[#allocation7 + $0x50] sm:$0xff]
    %v84 = vld [vmem:[#allocation7 + $0x58] sm:$0xff]
    %v85 = vld [vmem:[#allocation7 + $0x60] sm:$0xff]
    %v86 = vld [vmem:[#allocation7 + $0x68] sm:$0xff]
    %v87 = vld [vmem:[#allocation7 + $0x70] sm:$0xff]
    %v88 = vld [vmem:[#allocation7 + $0x78] sm:$0xff]
    %v89 = vld [vmem:[#allocation5] sm:$0xf]
    %v90 = vld [vmem:[#allocation8] sm:$0xff]
    %v91 = vld [vmem:[#allocation8 + $0x8] sm:$0xff]
    %v92 = vld [vmem:[#allocation8 + $0x10] sm:$0xff]
    %v93 = vld [vmem:[#allocation8 + $0x18] sm:$0xff]
    %v94 = vld [vmem:[#allocation8 + $0x20] sm:$0xff]
    %v95 = vld [vmem:[#allocation8 + $0x28] sm:$0xff]
    %v96 = vld [vmem:[#allocation8 + $0x30] sm:$0xff]
    %v97 = vld [vmem:[#allocation8 + $0x38] sm:$0xff]
    %v98 = vld [vmem:[#allocation8 + $0x40] sm:$0xff]
    %v99 = vld [vmem:[#allocation8 + $0x48] sm:$0xff]
    %v100 = vld [vmem:[#allocation8 + $0x50] sm:$0xff]
    %v101 = vld [vmem:[#allocation8 + $0x58] sm:$0xff]
    %v102 = vld [vmem:[#allocation8 + $0x60] sm:$0xff]
    %v103 = vld [vmem:[#allocation8 + $0x68] sm:$0xff]
    %v104 = vld [vmem:[#allocation8 + $0x70] sm:$0xff]
    %v105 = vld [vmem:[#allocation8 + $0x78] sm:$0xff]
    %106 = vmatprep.subr.mxu0 0.0
    %107 = vmatpush1.msra.mxu0 %v90
    %108 = vmatprep.subr.mxu0 0.0
    %109 = vmatpush1.msra.mxu0 %v91
    %110 = vmatprep.subr.mxu0 0.0
    %111 = vmatpush1.msra.mxu0 %v92
    %112 = vmatprep.subr.mxu0 0.0
    %113 = vmatpush1.msra.mxu0 %v93
    %114 = vmatprep.subr.mxu0 0.0
    %115 = vmatpush1.msra.mxu0 %v94
    %116 = vmatprep.subr.mxu0 0.0
    %117 = vmatpush1.msra.mxu0 %v95
    %118 = vmatprep.subr.mxu0 0.0
    %119 = vmatpush1.msra.mxu0 %v96
    %120 = vmatprep.subr.mxu0 0.0
    %121 = vmatpush1.msra.mxu0 %v97
    %122 = vmatprep.subr.mxu0 0.0
    %123 = vmatpush1.msra.mxu0 %v98
    %124 = vmatprep.subr.mxu0 0.0
    %125 = vmatpush1.msra.mxu0 %v99
    %126 = vmatprep.subr.mxu0 0.0
    %127 = vmatpush1.msra.mxu0 %v100
    %128 = vmatprep.subr.mxu0 0.0
    %129 = vmatpush1.msra.mxu0 %v101
    %130 = vmatprep.subr.mxu0 0.0
    %131 = vmatpush1.msra.mxu0 %v102
    %132 = vmatprep.subr.mxu0 0.0
    %133 = vmatpush1.msra.mxu0 %v103
    %134 = vmatprep.subr.mxu0 0.0
    %135 = vmatpush1.msra.mxu0 %v104
    %136 = vmatprep.subr.mxu0 0.0
    %137 = vmatpush1.msra.mxu0 %v105
    %138 = vmatprep.subr.mxu0 0.0
    %139 = vmatpush1.msra.mxu0 0.0
    %140 = vmatprep.subr.mxu0 0.0
    %141 = vmatpush1.msra.mxu0 0.0
    %142 = vmatprep.subr.mxu0 0.0
    %143 = vmatpush1.msra.mxu0 0.0
    %144 = vmatprep.subr.mxu0 0.0
    %145 = vmatpush1.msra.mxu0 0.0
    %146 = vmatprep.subr.mxu0 0.0
    %147 = vmatpush1.msra.mxu0 0.0
    %148 = vmatprep.subr.mxu0 0.0
    %149 = vmatpush1.msra.mxu0 0.0
    %150 = vmatprep.subr.mxu0 0.0
    %151 = vmatpush1.msra.mxu0 0.0
    %152 = vmatprep.subr.mxu0 0.0
    %153 = vmatpush1.msra.mxu0 0.0
    %154 = vmatprep.subr.mxu0 0.0
    %155 = vmatpush1.msra.mxu0 0.0
    %156 = vmatprep.subr.mxu0 0.0
    %157 = vmatpush1.msra.mxu0 0.0
    %158 = vmatprep.subr.mxu0 0.0
    %159 = vmatpush1.msra.mxu0 0.0
    %160 = vmatprep.subr.mxu0 0.0
    %161 = vmatpush1.msra.mxu0 0.0
    %162 = vmatprep.subr.mxu0 0.0
    %163 = vmatpush1.msra.mxu0 0.0
    %164 = vmatprep.subr.mxu0 0.0
    %165 = vmatpush1.msra.mxu0 0.0
    %166 = vmatprep.subr.mxu0 0.0
    %167 = vmatpush1.msra.mxu0 0.0
    %168 = vmatprep.subr.mxu0 0.0
    %169 = vmatpush1.msra.mxu0 0.0
    %170 = vmatprep.mubr.f32.mxu0 0.0
    %171 = vmatmul.mubr.f32.gmra.mrb[0].mxu0 %v89
    %v172 = vpop.f32.mrb[0].mxu0
    %v173 = vadd.f32 0.0, %v172
    %v174 = vpop.f32.mrb[0].mxu0
    %175 = vdwg.mxu0
    %176 = vmatprep.subr.mxu0 0.0
    %177 = vmatpush1.msra.mxu0 %v73
    %178 = vmatprep.subr.mxu0 0.0
    %179 = vmatpush1.msra.mxu0 %v74
    %180 = vmatprep.subr.mxu0 0.0
    %181 = vmatpush1.msra.mxu0 %v75
    %182 = vmatprep.subr.mxu0 0.0
    %183 = vmatpush1.msra.mxu0 %v76
    %184 = vmatprep.subr.mxu0 0.0
    %185 = vmatpush1.msra.mxu0 %v77
    %186 = vmatprep.subr.mxu0 0.0
    %187 = vmatpush1.msra.mxu0 %v78
    %188 = vmatprep.subr.mxu0 0.0
    %189 = vmatpush1.msra.mxu0 %v79
    %190 = vmatprep.subr.mxu0 0.0
    %191 = vmatpush1.msra.mxu0 %v80
    %192 = vmatprep.subr.mxu0 0.0
    %193 = vmatpush1.msra.mxu0 %v81
    %194 = vmatprep.subr.mxu0 0.0
    %195 = vmatpush1.msra.mxu0 %v82
    %196 = vmatprep.subr.mxu0 0.0
    %197 = vmatpush1.msra.mxu0 %v83
    %198 = vmatprep.subr.mxu0 0.0
    %199 = vmatpush1.msra.mxu0 %v84
    %200 = vmatprep.subr.mxu0 0.0
    %201 = vmatpush1.msra.mxu0 %v85
    %202 = vmatprep.subr.mxu0 0.0
    %203 = vmatpush1.msra.mxu0 %v86
    %204 = vmatprep.subr.mxu0 0.0
    %205 = vmatpush1.msra.mxu0 %v87
    %206 = vmatprep.subr.mxu0 0.0
    %207 = vmatpush1.msra.mxu0 %v88
    %208 = vmatprep.subr.mxu0 0.0
    %209 = vmatpush1.msra.mxu0 0.0
    %210 = vmatprep.subr.mxu0 0.0
    %211 = vmatpush1.msra.mxu0 0.0
    %212 = vmatprep.subr.mxu0 0.0
    %213 = vmatpush1.msra.mxu0 0.0
    %214 = vmatprep.subr.mxu0 0.0
    %215 = vmatpush1.msra.mxu0 0.0
    %216 = vmatprep.subr.mxu0 0.0
    %217 = vmatpush1.msra.mxu0 0.0
    %218 = vmatprep.subr.mxu0 0.0
    %219 = vmatpush1.msra.mxu0 0.0
    %220 = vmatprep.subr.mxu0 0.0
    %221 = vmatpush1.msra.mxu0 0.0
    %222 = vmatprep.subr.mxu0 0.0
    %223 = vmatpush1.msra.mxu0 0.0
    %224 = vmatprep.subr.mxu0 0.0
    %225 = vmatpush1.msra.mxu0 0.0
    %226 = vmatprep.subr.mxu0 0.0
    %227 = vmatpush1.msra.mxu0 0.0
    %228 = vmatprep.subr.mxu0 0.0
    %229 = vmatpush1.msra.mxu0 0.0
    %230 = vmatprep.subr.mxu0 0.0
    %231 = vmatpush1.msra.mxu0 0.0
    %232 = vmatprep.subr.mxu0 0.0
    %233 = vmatpush1.msra.mxu0 0.0
    %234 = vmatprep.subr.mxu0 0.0
    %235 = vmatpush1.msra.mxu0 0.0
    %236 = vmatprep.subr.mxu0 0.0
    %237 = vmatpush1.msra.mxu0 0.0
    %238 = vmatprep.subr.mxu0 0.0
    %239 = vmatpush1.msra.mxu0 0.0
    %240 = vmatprep.mubr.f32.mxu0 0.0
    %241 = vmatmul.mubr.f32.gmra.mrb[0].mxu0 %v72
    %v242 = vpop.f32.mrb[0].mxu0
    %v243 = vadd.f32 %v173, %v242
    %v244 = vpop.f32.mrb[0].mxu0
    %245 = vdwg.mxu0
    %v246 = vld [vmem:[%s4] sm:$0x1]
    %v248 = vlaneseq
    %v249 = vshrl.u32 %v248, 7
    %v250 = vsub.s32 0, %v249
    %v251 = vrot.slane %v246, %v250
    %v253 = vadd.f32 %v243, %v251
    %254 = vst [vmem:[#allocation10] sm:$0xf] %v253
    // Predicated region
    $region38: #{tpu_custom_call.1} parent=1 // pred_check
      _
    $region39: #{tpu_custom_call.1} parent=1 // pred_check_branch
      %256 = sbr.rel (0) target = $region41
    $region40: #{tpu_custom_call.1} parent=1 // pred_region
      %s258 = ssub.s32 64, 64
      %259 = vsyncadd [#allocation4], %s258
      %s261 = sshll.u32 [#allocation10], 4
      %s262 = int_to_ptr.vmem [resolvable:$true] %s261
      %264 = dma.vmem_to_hbm [thread:$0]  %s262, 64, %s5, [#allocation4]
    $region41: #{tpu_custom_call.1} parent=1 // pred_fallthru
      _
    // Predicated region
    $region42: #{tpu_custom_call.1} parent=1 // pred_check
      _
    $region43: #{tpu_custom_call.1} parent=1 // pred_check_branch
      %266 = sbr.rel (0) target = $region45
    $region44: #{tpu_custom_call.1} parent=1 // pred_region
      %267 = dma.done [#allocation4], 64
    $region45: #{tpu_custom_call.1} parent=1 // pred_fallthru
      _
    %268 = vsyncpa [#allocation3], 1
    %269 = vsyncpa [#allocation6], 1
    %270 = vsyncpa [#allocation9], 1
    %271 = vsyncpa [#allocation4], 1

</llo_original>
